<compile_context>
chip_gen: v7x
topology: tpu7x:2x2x1
jax: 0.10.0
libtpu: 0.0.40
codegen_flags: <defaults>
</compile_context>

<pallas_src>
import jax
import jax.numpy as jnp
from jax import lax
from jax.experimental import pallas as pl
from jax.experimental.pallas import tpu as pltpu

NEG_SLOPE = 0.01  # torch.nn.LeakyReLU default negative_slope


def _full_spec(shape):
    """BlockSpec covering the whole (small) array as one block."""
    ndim = len(shape)
    return pl.BlockSpec(tuple(shape), lambda *_: (0,) * ndim)


def _conv_pool_relu_layer(in_ref, w_ref, b_ref, patch_ref, conv_ref, out_ref, *,
                          N, C_in, C_out, K, L_in, L_out, L_pool, stride, pool,
                          neg_slope):
    """One Conv1d -> MaxPool1d -> LeakyReLU block, whole batch at once.

    in_ref    : (N*L_in,  C_in)   input activations (length-major, channels on lanes)
    w_ref     : (K*C_in,  C_out)  conv weight, flattened so row = k*C_in + c_in
    b_ref     : (1, C_out)        conv bias
    patch_ref : (N*L_out, K*C_in) im2col scratch (VMEM)
    conv_ref  : (N*L_out, C_out)  conv-output scratch (VMEM)
    out_ref   : (N*L_pool, C_out) block output (VMEM scratch or kernel output)
    """
    # ---- im2col: patch[n*L_out + l, k*C_in + c] = x[n, stride*l + k, c] ----
    # Static (Python-unrolled) loops over N and K; each copy is one contiguous (or
    # sublane-strided) slice along the sublane axis.
    for n in range(N):
        for k in range(K):
            src = (pl.ds(n * L_in + k, L_out) if stride == 1
                   else pl.ds(n * L_in + k, L_out, stride))
            patch_ref[pl.ds(n * L_out, L_out), pl.ds(k * C_in, C_in)] = (
                in_ref[src, :].astype(patch_ref.dtype))

    # ---- Conv1d as a single MXU matmul over the whole batch (f32 accumulate) ----
    conv = jnp.dot(patch_ref[...], w_ref[...],
                   preferred_element_type=jnp.float32)
    conv_ref[...] = conv + b_ref[...]

    # ---- MaxPool1d(pool) (floor mode) + LeakyReLU, per sample ----
    # Pool windows are sublane-strided Ref reads from the conv scratch (stride = pool);
    # the per-sample loop is required because pool windows must not cross sample
    # boundaries (L_out is generally not a multiple of pool).
    for n in range(N):
        base = n * L_out

        def _win(p):
            return (pl.ds(base + p, L_pool) if pool == 1
                    else pl.ds(base + p, L_pool, pool))

        pooled = conv_ref[_win(0), :]
        for p in range(1, pool):
            pooled = jnp.maximum(pooled, conv_ref[_win(p), :])

        y = jnp.where(pooled >= 0, pooled, neg_slope * pooled)
        out_ref[pl.ds(n * L_pool, L_pool), :] = y.astype(out_ref.dtype)


def _make_fused_kernel(cfgs, N, neg_slope=NEG_SLOPE):
    """Builds one kernel running every block; intermediates never leave VMEM."""
    n_layers = len(cfgs)

    def kernel(*refs):
        x_ref = refs[0]
        w_refs = refs[1:1 + 2 * n_layers:2]
        b_refs = refs[2:2 + 2 * n_layers:2]
        out_ref = refs[1 + 2 * n_layers]
        scratch = refs[2 + 2 * n_layers:]
        patch_refs = scratch[:n_layers]
        conv_refs = scratch[n_layers:2 * n_layers]
        act_refs = scratch[2 * n_layers:]

        in_ref = x_ref
        for i, cfg in enumerate(cfgs):
            dst_ref = out_ref if i == n_layers - 1 else act_refs[i]
            _conv_pool_relu_layer(in_ref, w_refs[i], b_refs[i],
                                  patch_refs[i], conv_refs[i], dst_ref,
                                  N=N, neg_slope=neg_slope, **cfg)
            in_ref = dst_ref

    return kernel


def feature_extractor(x, params, *, stride, pool_size):
    """x: (N, C_in, L) NCL; params: list of (w (C_out,C_in,K), b (C_out,)) per block."""
    N, C0, L0 = x.shape

    cfgs = []
    flat_inputs = []
    C_in, L_in = C0, L0
    for (w, b) in params:
        C_out, c_in_w, K = w.shape
        assert c_in_w == C_in, "channel mismatch in param stack"
        L_out = (L_in - K) // stride + 1
        L_pool = L_out // pool_size
        assert L_out >= 1 and L_pool >= 1, "input too short for this block config"
        cfgs.append(dict(C_in=C_in, C_out=C_out, K=K, L_in=L_in, L_out=L_out,
                         L_pool=L_pool, stride=stride, pool=pool_size))
        # w_flat[k*C_in + c_in, c_out] = w[c_out, c_in, k]  (matches im2col column order)
        w_flat = jnp.transpose(w, (2, 1, 0)).reshape(K * C_in, C_out).astype(jnp.float32)
        b_row = b.reshape(1, C_out).astype(jnp.float32)
        flat_inputs += [w_flat, b_row]
        C_in, L_in = C_out, L_pool

    # Length-major, channel-on-lanes layout inside the kernel: (N*L, C).
    x2d = jnp.transpose(x, (0, 2, 1)).reshape(N * L0, C0).astype(jnp.float32)
    out_rows = N * cfgs[-1]["L_pool"]
    out_cols = cfgs[-1]["C_out"]

    kernel = _make_fused_kernel(cfgs, N)

    scratch_shapes = (
        # im2col patch scratch per layer
        [pltpu.VMEM((N * c["L_out"], c["K"] * c["C_in"]), jnp.float32) for c in cfgs]
        # conv-output scratch per layer (re-read with strided slices for pooling)
        + [pltpu.VMEM((N * c["L_out"], c["C_out"]), jnp.float32) for c in cfgs]
        # inter-layer activation scratch (all but last layer)
        + [pltpu.VMEM((N * c["L_pool"], c["C_out"]), jnp.float32) for c in cfgs[:-1]]
    )

    out2d = pl.pallas_call(
        kernel,
        out_shape=jax.ShapeDtypeStruct((out_rows, out_cols), x.dtype),
        grid_spec=pltpu.PrefetchScalarGridSpec(
            num_scalar_prefetch=0,
            grid=(1,),
            in_specs=[_full_spec(x2d.shape)] + [_full_spec(t.shape) for t in flat_inputs],
            out_specs=_full_spec((out_rows, out_cols)),
            scratch_shapes=scratch_shapes,
        ),
        compiler_params=pltpu.CompilerParams(dimension_semantics=("arbitrary",)),
    )(x2d, *flat_inputs)

    Lp, Co = cfgs[-1]["L_pool"], cfgs[-1]["C_out"]
    # Back to PyTorch NCL layout (pure layout plumbing in the wrapper).
    return jnp.transpose(out2d.reshape(N, Lp, Co), (0, 2, 1))


def init_params(key, in_channels, out_channels, kernel_size):
    """Deterministic conv weights/biases (PyTorch-style uniform fan-in scaling)."""
    params = []
    for c_in, c_out, k in zip(in_channels, out_channels, kernel_size):
        key, kw, kb = jax.random.split(key, 3)
        bound = 1.0 / (c_in * k) ** 0.5
        w = jax.random.uniform(kw, (c_out, c_in, k), jnp.float32, -bound, bound)
        b = jax.random.uniform(kb, (c_out,), jnp.float32, -bound, bound)
        params.append((w, b))
    return params


def reference(x, params, *, stride, pool_size):
    """Pure-JAX reference (lax conv) replicating the PyTorch forward exactly."""
    for (w, b) in params:
        y = lax.conv_general_dilated(
            x, w, window_strides=(stride,), padding="VALID",
            dimension_numbers=("NCH", "OIH", "NCH"))
        y = y + b[None, :, None]
        N, C, L = y.shape
        Lp = L // pool_size
        y = y[:, :, : Lp * pool_size].reshape(N, C, Lp, pool_size).max(axis=-1)
        x = jnp.where(y >= 0, y, NEG_SLOPE * y)
    return x


if __name__ == "__main__":
    # Module config: FeatureExtractor(in_channels=[4, 8], out_channels=[8, 16],
    #                                 kernel_size=[3, 3], pool_size=2, stride=1)
    in_channels = [4, 8]
    out_channels = [8, 16]
    kernel_size = [3, 3]
    pool_size = 2
    stride = 1

    key = jax.random.PRNGKey(0)
    key, kx = jax.random.split(key)
    x = jax.random.normal(kx, (2, 4, 16), jnp.float32)   # (N, C_in, L)

    params = init_params(key, in_channels, out_channels, kernel_size)

    out = feature_extractor(x, params, stride=stride, pool_size=pool_size)
    out = jax.block_until_ready(out)

    ref = jax.block_until_ready(reference(x, params, stride=stride, pool_size=pool_size))
    assert out.shape == ref.shape, (out.shape, ref.shape)
    assert jnp.allclose(out, ref, atol=1e-5, rtol=1e-5), "mismatch vs reference"

    print("KERNEL_OK")
</pallas_src>

<mosaic_0001>
module attributes {stable_mosaic.version = 11 : i64} {
  func.func @kernel(%arg0: i32, %arg1: memref<32x4xf32, #tpu.memory_space<vmem>>, %arg2: memref<12x8xf32, #tpu.memory_space<vmem>>, %arg3: memref<1x8xf32, #tpu.memory_space<vmem>>, %arg4: memref<24x16xf32, #tpu.memory_space<vmem>>, %arg5: memref<1x16xf32, #tpu.memory_space<vmem>>, %arg6: memref<4x16xf32, #tpu.memory_space<vmem>>, %arg7: memref<28x12xf32, #tpu.memory_space<vmem>>, %arg8: memref<10x24xf32, #tpu.memory_space<vmem>>, %arg9: memref<28x8xf32, #tpu.memory_space<vmem>>, %arg10: memref<10x16xf32, #tpu.memory_space<vmem>>, %arg11: memref<14x8xf32, #tpu.memory_space<vmem>>) attributes {dimension_semantics = [#tpu.dimension_semantics<arbitrary>], iteration_bounds = array<i64: 1>, scalar_prefetch = 0 : i64, scratch_operands = 5 : i64, tpu.core_type = #tpu.core_type<tc>, window_params = [{pipeline_mode = #tpu.pipeline_mode<synchronous>, transform_indices = @transform_0, window_bounds = array<i64: 32, 4>}, {pipeline_mode = #tpu.pipeline_mode<synchronous>, transform_indices = @transform_1, window_bounds = array<i64: 12, 8>}, {pipeline_mode = #tpu.pipeline_mode<synchronous>, transform_indices = @transform_2, window_bounds = array<i64: 1, 8>}, {pipeline_mode = #tpu.pipeline_mode<synchronous>, transform_indices = @transform_3, window_bounds = array<i64: 24, 16>}, {pipeline_mode = #tpu.pipeline_mode<synchronous>, transform_indices = @transform_4, window_bounds = array<i64: 1, 16>}, {pipeline_mode = #tpu.pipeline_mode<synchronous>, transform_indices = @transform_5, window_bounds = array<i64: 4, 16>}]} {
    %c0 = arith.constant 0 : index
    %c0_0 = arith.constant 0 : index
    %0 = vector.load %arg1[%c0, %c0_0] : memref<32x4xf32, #tpu.memory_space<vmem>>, vector<14x4xf32>
    %c0_1 = arith.constant 0 : index
    %c0_2 = arith.constant 0 : index
    %1 = vector.load %arg7[%c0_1, %c0_2] : memref<28x12xf32, #tpu.memory_space<vmem>>, vector<14x4xf32>
    tpu.vector_store %arg7[%c0_1, %c0_2], %0 {strides = array<i32>} : memref<28x12xf32, #tpu.memory_space<vmem>>, vector<14x4xf32>,
    %c1 = arith.constant 1 : index
    %c0_3 = arith.constant 0 : index
    %2 = vector.load %arg1[%c1, %c0_3] : memref<32x4xf32, #tpu.memory_space<vmem>>, vector<14x4xf32>
    %c0_4 = arith.constant 0 : index
    %c4 = arith.constant 4 : index
    %3 = vector.load %arg7[%c0_4, %c4] : memref<28x12xf32, #tpu.memory_space<vmem>>, vector<14x4xf32>
    tpu.vector_store %arg7[%c0_4, %c4], %2 {strides = array<i32>} : memref<28x12xf32, #tpu.memory_space<vmem>>, vector<14x4xf32>,
    %c2 = arith.constant 2 : index
    %c0_5 = arith.constant 0 : index
    %4 = vector.load %arg1[%c2, %c0_5] : memref<32x4xf32, #tpu.memory_space<vmem>>, vector<14x4xf32>
    %c0_6 = arith.constant 0 : index
    %c8 = arith.constant 8 : index
    %5 = vector.load %arg7[%c0_6, %c8] : memref<28x12xf32, #tpu.memory_space<vmem>>, vector<14x4xf32>
    tpu.vector_store %arg7[%c0_6, %c8], %4 {strides = array<i32>} : memref<28x12xf32, #tpu.memory_space<vmem>>, vector<14x4xf32>,
    %c16 = arith.constant 16 : index
    %c0_7 = arith.constant 0 : index
    %6 = vector.load %arg1[%c16, %c0_7] : memref<32x4xf32, #tpu.memory_space<vmem>>, vector<14x4xf32>
    %c14 = arith.constant 14 : index
    %c0_8 = arith.constant 0 : index
    %7 = vector.load %arg7[%c14, %c0_8] : memref<28x12xf32, #tpu.memory_space<vmem>>, vector<14x4xf32>
    tpu.vector_store %arg7[%c14, %c0_8], %6 {strides = array<i32>} : memref<28x12xf32, #tpu.memory_space<vmem>>, vector<14x4xf32>,
    %c17 = arith.constant 17 : index
    %c0_9 = arith.constant 0 : index
    %8 = vector.load %arg1[%c17, %c0_9] : memref<32x4xf32, #tpu.memory_space<vmem>>, vector<14x4xf32>
    %c14_10 = arith.constant 14 : index
    %c4_11 = arith.constant 4 : index
    %9 = vector.load %arg7[%c14_10, %c4_11] : memref<28x12xf32, #tpu.memory_space<vmem>>, vector<14x4xf32>
    tpu.vector_store %arg7[%c14_10, %c4_11], %8 {strides = array<i32>} : memref<28x12xf32, #tpu.memory_space<vmem>>, vector<14x4xf32>,
    %c18 = arith.constant 18 : index
    %c0_12 = arith.constant 0 : index
    %10 = vector.load %arg1[%c18, %c0_12] : memref<32x4xf32, #tpu.memory_space<vmem>>, vector<14x4xf32>
    %c14_13 = arith.constant 14 : index
    %c8_14 = arith.constant 8 : index
    %11 = vector.load %arg7[%c14_13, %c8_14] : memref<28x12xf32, #tpu.memory_space<vmem>>, vector<14x4xf32>
    tpu.vector_store %arg7[%c14_13, %c8_14], %10 {strides = array<i32>} : memref<28x12xf32, #tpu.memory_space<vmem>>, vector<14x4xf32>,
    %c0_15 = arith.constant 0 : index
    %c0_16 = arith.constant 0 : index
    %12 = vector.load %arg7[%c0_15, %c0_16] : memref<28x12xf32, #tpu.memory_space<vmem>>, vector<28x12xf32>
    %c0_17 = arith.constant 0 : index
    %c0_18 = arith.constant 0 : index
    %13 = vector.load %arg2[%c0_17, %c0_18] : memref<12x8xf32, #tpu.memory_space<vmem>>, vector<12x8xf32>
    %cst = arith.constant dense<0.000000e+00> : vector<28x8xf32>
    %14 = tpu.matmul %12, %13, %cst {dimension_numbers = #tpu.dot_dimension_numbers<[1], [0], [0], [1], [0, 0, 1, 1], [], []>} : vector<28x12xf32>, vector<12x8xf32>, vector<28x8xf32> -> vector<28x8xf32>
    %c0_19 = arith.constant 0 : index
    %c0_20 = arith.constant 0 : index
    %15 = vector.load %arg3[%c0_19, %c0_20] : memref<1x8xf32, #tpu.memory_space<vmem>>, vector<1x8xf32>
    %16 = vector.broadcast %15 : vector<1x8xf32> to vector<28x8xf32>
    %17 = arith.addf %14, %16 : vector<28x8xf32>
    %c0_21 = arith.constant 0 : index
    %c0_22 = arith.constant 0 : index
    %18 = vector.load %arg9[%c0_21, %c0_22] : memref<28x8xf32, #tpu.memory_space<vmem>>, vector<28x8xf32>
    tpu.vector_store %arg9[%c0_21, %c0_22], %17 {strides = array<i32>} : memref<28x8xf32, #tpu.memory_space<vmem>>, vector<28x8xf32>,
    %c0_23 = arith.constant 0 : index
    %c0_24 = arith.constant 0 : index
    %19 = tpu.strided_load %arg9[%c0_23, %c0_24] {strides = array<i32: 2, 1>} : memref<28x8xf32, #tpu.memory_space<vmem>>, vector<7x8xf32>
    %c1_25 = arith.constant 1 : index
    %c0_26 = arith.constant 0 : index
    %20 = tpu.strided_load %arg9[%c1_25, %c0_26] {strides = array<i32: 2, 1>} : memref<28x8xf32, #tpu.memory_space<vmem>>, vector<7x8xf32>
    %21 = arith.maximumf %19, %20 : vector<7x8xf32>
    %cst_27 = arith.constant 0.000000e+00 : f32
    %22 = vector.broadcast %cst_27 : f32 to vector<7x8xf32>
    %23 = arith.cmpf oge, %21, %22 : vector<7x8xf32>
    %cst_28 = arith.constant 0.00999999977 : f32
    %24 = vector.broadcast %cst_28 : f32 to vector<7x8xf32>
    %25 = arith.mulf %24, %21 : vector<7x8xf32>
    %26 = arith.select %23, %21, %25 : vector<7x8xi1>, vector<7x8xf32>
    %c0_29 = arith.constant 0 : index
    %c0_30 = arith.constant 0 : index
    %27 = vector.load %arg11[%c0_29, %c0_30] : memref<14x8xf32, #tpu.memory_space<vmem>>, vector<7x8xf32>
    tpu.vector_store %arg11[%c0_29, %c0_30], %26 {strides = array<i32>} : memref<14x8xf32, #tpu.memory_space<vmem>>, vector<7x8xf32>,
    %c14_31 = arith.constant 14 : index
    %c0_32 = arith.constant 0 : index
    %28 = tpu.strided_load %arg9[%c14_31, %c0_32] {strides = array<i32: 2, 1>} : memref<28x8xf32, #tpu.memory_space<vmem>>, vector<7x8xf32>
    %c15 = arith.constant 15 : index
    %c0_33 = arith.constant 0 : index
    %29 = tpu.strided_load %arg9[%c15, %c0_33] {strides = array<i32: 2, 1>} : memref<28x8xf32, #tpu.memory_space<vmem>>, vector<7x8xf32>
    %30 = arith.maximumf %28, %29 : vector<7x8xf32>
    %cst_34 = arith.constant 0.000000e+00 : f32
    %31 = vector.broadcast %cst_34 : f32 to vector<7x8xf32>
    %32 = arith.cmpf oge, %30, %31 : vector<7x8xf32>
    %cst_35 = arith.constant 0.00999999977 : f32
    %33 = vector.broadcast %cst_35 : f32 to vector<7x8xf32>
    %34 = arith.mulf %33, %30 : vector<7x8xf32>
    %35 = arith.select %32, %30, %34 : vector<7x8xi1>, vector<7x8xf32>
    %c7 = arith.constant 7 : index
    %c0_36 = arith.constant 0 : index
    %36 = vector.load %arg11[%c7, %c0_36] : memref<14x8xf32, #tpu.memory_space<vmem>>, vector<7x8xf32>
    tpu.vector_store %arg11[%c7, %c0_36], %35 {strides = array<i32>} : memref<14x8xf32, #tpu.memory_space<vmem>>, vector<7x8xf32>,
    %c0_37 = arith.constant 0 : index
    %c0_38 = arith.constant 0 : index
    %37 = vector.load %arg11[%c0_37, %c0_38] : memref<14x8xf32, #tpu.memory_space<vmem>>, vector<5x8xf32>
    %c0_39 = arith.constant 0 : index
    %c0_40 = arith.constant 0 : index
    %38 = vector.load %arg8[%c0_39, %c0_40] : memref<10x24xf32, #tpu.memory_space<vmem>>, vector<5x8xf32>
    tpu.vector_store %arg8[%c0_39, %c0_40], %37 {strides = array<i32>} : memref<10x24xf32, #tpu.memory_space<vmem>>, vector<5x8xf32>,
    %c1_41 = arith.constant 1 : index
    %c0_42 = arith.constant 0 : index
    %39 = vector.load %arg11[%c1_41, %c0_42] : memref<14x8xf32, #tpu.memory_space<vmem>>, vector<5x8xf32>
    %c0_43 = arith.constant 0 : index
    %c8_44 = arith.constant 8 : index
    %40 = vector.load %arg8[%c0_43, %c8_44] : memref<10x24xf32, #tpu.memory_space<vmem>>, vector<5x8xf32>
    tpu.vector_store %arg8[%c0_43, %c8_44], %39 {strides = array<i32>} : memref<10x24xf32, #tpu.memory_space<vmem>>, vector<5x8xf32>,
    %c2_45 = arith.constant 2 : index
    %c0_46 = arith.constant 0 : index
    %41 = vector.load %arg11[%c2_45, %c0_46] : memref<14x8xf32, #tpu.memory_space<vmem>>, vector<5x8xf32>
    %c0_47 = arith.constant 0 : index
    %c16_48 = arith.constant 16 : index
    %42 = vector.load %arg8[%c0_47, %c16_48] : memref<10x24xf32, #tpu.memory_space<vmem>>, vector<5x8xf32>
    tpu.vector_store %arg8[%c0_47, %c16_48], %41 {strides = array<i32>} : memref<10x24xf32, #tpu.memory_space<vmem>>, vector<5x8xf32>,
    %c7_49 = arith.constant 7 : index
    %c0_50 = arith.constant 0 : index
    %43 = vector.load %arg11[%c7_49, %c0_50] : memref<14x8xf32, #tpu.memory_space<vmem>>, vector<5x8xf32>
    %c5 = arith.constant 5 : index
    %c0_51 = arith.constant 0 : index
    %44 = vector.load %arg8[%c5, %c0_51] : memref<10x24xf32, #tpu.memory_space<vmem>>, vector<5x8xf32>
    tpu.vector_store %arg8[%c5, %c0_51], %43 {strides = array<i32>} : memref<10x24xf32, #tpu.memory_space<vmem>>, vector<5x8xf32>,
    %c8_52 = arith.constant 8 : index
    %c0_53 = arith.constant 0 : index
    %45 = vector.load %arg11[%c8_52, %c0_53] : memref<14x8xf32, #tpu.memory_space<vmem>>, vector<5x8xf32>
    %c5_54 = arith.constant 5 : index
    %c8_55 = arith.constant 8 : index
    %46 = vector.load %arg8[%c5_54, %c8_55] : memref<10x24xf32, #tpu.memory_space<vmem>>, vector<5x8xf32>
    tpu.vector_store %arg8[%c5_54, %c8_55], %45 {strides = array<i32>} : memref<10x24xf32, #tpu.memory_space<vmem>>, vector<5x8xf32>,
    %c9 = arith.constant 9 : index
    %c0_56 = arith.constant 0 : index
    %47 = vector.load %arg11[%c9, %c0_56] : memref<14x8xf32, #tpu.memory_space<vmem>>, vector<5x8xf32>
    %c5_57 = arith.constant 5 : index
    %c16_58 = arith.constant 16 : index
    %48 = vector.load %arg8[%c5_57, %c16_58] : memref<10x24xf32, #tpu.memory_space<vmem>>, vector<5x8xf32>
    tpu.vector_store %arg8[%c5_57, %c16_58], %47 {strides = array<i32>} : memref<10x24xf32, #tpu.memory_space<vmem>>, vector<5x8xf32>,
    %c0_59 = arith.constant 0 : index
    %c0_60 = arith.constant 0 : index
    %49 = vector.load %arg8[%c0_59, %c0_60] : memref<10x24xf32, #tpu.memory_space<vmem>>, vector<10x24xf32>
    %c0_61 = arith.constant 0 : index
    %c0_62 = arith.constant 0 : index
    %50 = vector.load %arg4[%c0_61, %c0_62] : memref<24x16xf32, #tpu.memory_space<vmem>>, vector<24x16xf32>
    %cst_63 = arith.constant dense<0.000000e+00> : vector<10x16xf32>
    %51 = tpu.matmul %49, %50, %cst_63 {dimension_numbers = #tpu.dot_dimension_numbers<[1], [0], [0], [1], [0, 0, 1, 1], [], []>} : vector<10x24xf32>, vector<24x16xf32>, vector<10x16xf32> -> vector<10x16xf32>
    %c0_64 = arith.constant 0 : index
    %c0_65 = arith.constant 0 : index
    %52 = vector.load %arg5[%c0_64, %c0_65] : memref<1x16xf32, #tpu.memory_space<vmem>>, vector<1x16xf32>
    %53 = vector.broadcast %52 : vector<1x16xf32> to vector<10x16xf32>
    %54 = arith.addf %51, %53 : vector<10x16xf32>
    %c0_66 = arith.constant 0 : index
    %c0_67 = arith.constant 0 : index
    %55 = vector.load %arg10[%c0_66, %c0_67] : memref<10x16xf32, #tpu.memory_space<vmem>>, vector<10x16xf32>
    tpu.vector_store %arg10[%c0_66, %c0_67], %54 {strides = array<i32>} : memref<10x16xf32, #tpu.memory_space<vmem>>, vector<10x16xf32>,
    %c0_68 = arith.constant 0 : index
    %c0_69 = arith.constant 0 : index
    %56 = tpu.strided_load %arg10[%c0_68, %c0_69] {strides = array<i32: 2, 1>} : memref<10x16xf32, #tpu.memory_space<vmem>>, vector<2x16xf32>
    %c1_70 = arith.constant 1 : index
    %c0_71 = arith.constant 0 : index
    %57 = tpu.strided_load %arg10[%c1_70, %c0_71] {strides = array<i32: 2, 1>} : memref<10x16xf32, #tpu.memory_space<vmem>>, vector<2x16xf32>
    %58 = arith.maximumf %56, %57 : vector<2x16xf32>
    %cst_72 = arith.constant 0.000000e+00 : f32
    %59 = vector.broadcast %cst_72 : f32 to vector<2x16xf32>
    %60 = arith.cmpf oge, %58, %59 : vector<2x16xf32>
    %cst_73 = arith.constant 0.00999999977 : f32
    %61 = vector.broadcast %cst_73 : f32 to vector<2x16xf32>
    %62 = arith.mulf %61, %58 : vector<2x16xf32>
    %63 = arith.select %60, %58, %62 : vector<2x16xi1>, vector<2x16xf32>
    %c0_74 = arith.constant 0 : index
    %c0_75 = arith.constant 0 : index
    %64 = vector.load %arg6[%c0_74, %c0_75] : memref<4x16xf32, #tpu.memory_space<vmem>>, vector<2x16xf32>
    tpu.vector_store %arg6[%c0_74, %c0_75], %63 {strides = array<i32>} : memref<4x16xf32, #tpu.memory_space<vmem>>, vector<2x16xf32>,
    %c5_76 = arith.constant 5 : index
    %c0_77 = arith.constant 0 : index
    %65 = tpu.strided_load %arg10[%c5_76, %c0_77] {strides = array<i32: 2, 1>} : memref<10x16xf32, #tpu.memory_space<vmem>>, vector<2x16xf32>
    %c6 = arith.constant 6 : index
    %c0_78 = arith.constant 0 : index
    %66 = tpu.strided_load %arg10[%c6, %c0_78] {strides = array<i32: 2, 1>} : memref<10x16xf32, #tpu.memory_space<vmem>>, vector<2x16xf32>
    %67 = arith.maximumf %65, %66 : vector<2x16xf32>
    %cst_79 = arith.constant 0.000000e+00 : f32
    %68 = vector.broadcast %cst_79 : f32 to vector<2x16xf32>
    %69 = arith.cmpf oge, %67, %68 : vector<2x16xf32>
    %cst_80 = arith.constant 0.00999999977 : f32
    %70 = vector.broadcast %cst_80 : f32 to vector<2x16xf32>
    %71 = arith.mulf %70, %67 : vector<2x16xf32>
    %72 = arith.select %69, %67, %71 : vector<2x16xi1>, vector<2x16xf32>
    %c2_81 = arith.constant 2 : index
    %c0_82 = arith.constant 0 : index
    %73 = vector.load %arg6[%c2_81, %c0_82] : memref<4x16xf32, #tpu.memory_space<vmem>>, vector<2x16xf32>
    tpu.vector_store %arg6[%c2_81, %c0_82], %72 {strides = array<i32>} : memref<4x16xf32, #tpu.memory_space<vmem>>, vector<2x16xf32>,
    return
  }
  func.func @transform_0(%arg0: i32) -> (i32, i32) {
    %c0_i32 = arith.constant 0 : i32
    %c0_i32_0 = arith.constant 0 : i32
    %c0_i32_1 = arith.constant 0 : i32
    return %c0_i32, %c0_i32_0 : i32, i32
  }
  func.func @transform_1(%arg0: i32) -> (i32, i32) {
    %c0_i32 = arith.constant 0 : i32
    %c0_i32_0 = arith.constant 0 : i32
    %c0_i32_1 = arith.constant 0 : i32
    return %c0_i32, %c0_i32_0 : i32, i32
  }
  func.func @transform_2(%arg0: i32) -> (i32, i32) {
    %c0_i32 = arith.constant 0 : i32
    %c0_i32_0 = arith.constant 0 : i32
    %c0_i32_1 = arith.constant 0 : i32
    return %c0_i32, %c0_i32_0 : i32, i32
  }
  func.func @transform_3(%arg0: i32) -> (i32, i32) {
    %c0_i32 = arith.constant 0 : i32
    %c0_i32_0 = arith.constant 0 : i32
    %c0_i32_1 = arith.constant 0 : i32
    return %c0_i32, %c0_i32_0 : i32, i32
  }
  func.func @transform_4(%arg0: i32) -> (i32, i32) {
    %c0_i32 = arith.constant 0 : i32
    %c0_i32_0 = arith.constant 0 : i32
    %c0_i32_1 = arith.constant 0 : i32
    return %c0_i32, %c0_i32_0 : i32, i32
  }
  func.func @transform_5(%arg0: i32) -> (i32, i32) {
    %c0_i32 = arith.constant 0 : i32
    %c0_i32_0 = arith.constant 0 : i32
    %c0_i32_1 = arith.constant 0 : i32
    return %c0_i32, %c0_i32_0 : i32, i32
  }
}

</mosaic_0001>

<llo_original>
// kernel: tpu_custom_call.1
$region0: #{tpu_custom_call.1}
  #allocation0 [shape = 'u32[]', space=smem, size = 0x4, offset = 0x4, fixed_abs, tag = 'smem constant byte address 0x4 - core index']
  #allocation1 [shape = 'u32[144,128]{1,0:T(1,128)}', space=vmem, size = 0x12000, scoped, tag = 'internal scratch']
  #allocation2 [shape = 'f32[28,12]{1,0:T(8,128)}', space=vmem, size = 0x4000, scoped, tag = 'scratch operand']
  #allocation3 [shape = 'f32[10,24]{1,0:T(8,128)}', space=vmem, size = 0x2000, scoped, tag = 'scratch operand']
  #allocation4 [shape = 'f32[28,8]{1,0:T(8,128)}', space=vmem, size = 0x4000, scoped, tag = 'scratch operand']
  #allocation5 [shape = 'f32[10,16]{1,0:T(8,128)}', space=vmem, size = 0x2000, scoped, tag = 'scratch operand']
  #allocation6 [shape = 'f32[14,8]{1,0:T(8,128)}', space=vmem, size = 0x2000, scoped, tag = 'scratch operand']
  %s0 = inlined_call_operand.vmem [shape: f32[32,4], index: 0, kind: input, shape index: {}]
  %s1 = inlined_call_operand.vmem [shape: f32[12,8], index: 1, kind: input, shape index: {}]
  %s2 = inlined_call_operand.vmem [shape: f32[1,8], index: 2, kind: input, shape index: {}]
  %s3 = inlined_call_operand.vmem [shape: f32[24,16], index: 3, kind: input, shape index: {}]
  %s4 = inlined_call_operand.vmem [shape: f32[1,16], index: 4, kind: input, shape index: {}]
  %s5 = inlined_call_operand.hbm [shape: f32[4,16], index: 5, kind: output, shape index: {}]
  %s6 = sld [smem:[#allocation0]]
  $region30: #{tpu_custom_call.1} parent=0
    _
  %s8 = ssub.s32 1, %s6
  %s9 = scalar_select 0, %s8, %s6
  $region1: #{tpu_custom_call.1} parent=0
    #allocation7 [shape = 'u8[2048]{0}', space=vmem, size = 0x800, scoped, tag = 'output window, operand 0, single buffered']
    #allocation8 [shape = 's32[1]{0}', space=sflag, size = 0x4, scoped, tag = 'scoped memory for tpu_custom_call.1']
    %10 = vsyncpa [#allocation8], 0
    // Predicated region
    $region2: #{tpu_custom_call.1} parent=1 // pred_check
      _
    $region3: #{tpu_custom_call.1} parent=1 // pred_check_branch
      %12 = sbr.rel (0) target = $region5
    $region4: #{tpu_custom_call.1} parent=1 // pred_region
      _
    $region5: #{tpu_custom_call.1} parent=1 // pred_fallthru
      _
    // Predicated region
    $region6: #{tpu_custom_call.1} parent=1 // pred_check
      _
    $region7: #{tpu_custom_call.1} parent=1 // pred_check_branch
      %14 = sbr.rel (0) target = $region9
    $region8: #{tpu_custom_call.1} parent=1 // pred_region
      _
    $region9: #{tpu_custom_call.1} parent=1 // pred_fallthru
      _
    // Predicated region
    $region10: #{tpu_custom_call.1} parent=1 // pred_check
      _
    $region11: #{tpu_custom_call.1} parent=1 // pred_check_branch
      %16 = sbr.rel (0) target = $region13
    $region12: #{tpu_custom_call.1} parent=1 // pred_region
      _
    $region13: #{tpu_custom_call.1} parent=1 // pred_fallthru
      _
    // Predicated region
    $region14: #{tpu_custom_call.1} parent=1 // pred_check
      _
    $region15: #{tpu_custom_call.1} parent=1 // pred_check_branch
      %18 = sbr.rel (0) target = $region17
    $region16: #{tpu_custom_call.1} parent=1 // pred_region
      _
    $region17: #{tpu_custom_call.1} parent=1 // pred_fallthru
      _
    // Predicated region
    $region18: #{tpu_custom_call.1} parent=1 // pred_check
      _
    $region19: #{tpu_custom_call.1} parent=1 // pred_check_branch
      %20 = sbr.rel (0) target = $region21
    $region20: #{tpu_custom_call.1} parent=1 // pred_region
      _
    $region21: #{tpu_custom_call.1} parent=1 // pred_fallthru
      _
    %v21 = vld [vmem:[%s0] sm:$0xff]
    %v22 = vld [vmem:[%s0 + $0x8] sm:$0x3f]
    %vm23 = vcmask 31744
    %24 = vst.msk [vmem:[#allocation2] sm:$0xff] %vm23, %v21
    %vm25 = vcmask 29696
    %26 = vst.msk [vmem:[#allocation2 + $0x8] sm:$0x3f] %vm25, %v22
    %v27 = vld [vmem:[%s0 + $0x1] sm:$0xff]
    %v28 = vld [vmem:[%s0 + $0x9] sm:$0x3f]
    %31 = vrot.lane.b32.xlu0 %v27, 4
    %v32 = vpop.permute.xlu0 %31
    %33 = vrot.lane.b32.xlu0 %v28, 4
    %v34 = vpop.permute.xlu0 %33
    %vm37 = vcmask 64544
    %38 = vst.msk [vmem:[#allocation2] sm:$0xff] %vm37, %v32
    %vm39 = vcmask 62496
    %40 = vst.msk [vmem:[#allocation2 + $0x8] sm:$0x3f] %vm39, %v34
    %v41 = vld [vmem:[%s0 + $0x2] sm:$0xff]
    %v42 = vld [vmem:[%s0 + $0xa] sm:$0x3f]
    %45 = vrot.lane.b32.xlu0 %v41, 8
    %v46 = vpop.permute.xlu0 %45
    %47 = vrot.lane.b32.xlu0 %v42, 8
    %v48 = vpop.permute.xlu0 %47
    %vm51 = vcmask 97344
    %52 = vst.msk [vmem:[#allocation2] sm:$0xff] %vm51, %v46
    %vm53 = vcmask 95296
    %54 = vst.msk [vmem:[#allocation2 + $0x8] sm:$0x3f] %vm53, %v48
    %v55 = vld [vmem:[%s0 + $0x10] sm:$0xff]
    %v56 = vld [vmem:[%s0 + $0x18] sm:$0x3f]
    %57 = vst.msk [vmem:[#allocation2 + $0xe] sm:$0xff] %vm23, %v55
    %58 = vst.msk [vmem:[#allocation2 + $0x16] sm:$0x3f] %vm25, %v56
    %v59 = vld [vmem:[%s0 + $0x11] sm:$0xff]
    %v60 = vld [vmem:[%s0 + $0x19] sm:$0x3f]
    %63 = vrot.lane.b32.xlu0 %v59, 4
    %v64 = vpop.permute.xlu0 %63
    %65 = vrot.lane.b32.xlu0 %v60, 4
    %v66 = vpop.permute.xlu0 %65
    %69 = vst.msk [vmem:[#allocation2 + $0xe] sm:$0xff] %vm37, %v64
    %70 = vst.msk [vmem:[#allocation2 + $0x16] sm:$0x3f] %vm39, %v66
    %v71 = vld [vmem:[%s0 + $0x12] sm:$0xff]
    %v72 = vld [vmem:[%s0 + $0x1a] sm:$0x3f]
    %75 = vrot.lane.b32.xlu0 %v71, 8
    %v76 = vpop.permute.xlu0 %75
    %77 = vrot.lane.b32.xlu0 %v72, 8
    %v78 = vpop.permute.xlu0 %77
    %81 = vst.msk [vmem:[#allocation2 + $0xe] sm:$0xff] %vm51, %v76
    %82 = vst.msk [vmem:[#allocation2 + $0x16] sm:$0x3f] %vm53, %v78
    %v83 = vld [vmem:[#allocation2] sm:$0xff]
    %v84 = vld [vmem:[#allocation2 + $0x8] sm:$0xff]
    %v85 = vld [vmem:[#allocation2 + $0x10] sm:$0xff]
    %v86 = vld [vmem:[#allocation2 + $0x18] sm:$0xf]
    %v87 = vld [vmem:[%s1] sm:$0xff]
    %v88 = vld [vmem:[%s1 + $0x8] sm:$0xf]
    %v89 = vld [vmem:[%s2] sm:$0x1]
    %v91 = vlaneseq
    %v92 = vshrl.u32 %v91, 7
    %v93 = vsub.s32 0, %v92
    %v94 = vrot.slane %v89, %v93
    %vm96 = vcmask 97280
    %v98 = vsel %vm96, %v83, 0
    %v101 = vsel %vm96, %v84, 0
    %v104 = vsel %vm96, %v85, 0
    %v107 = vsel %vm96, %v86, 0
    %vm109 = vcmask 1043456
    %v111 = vsel %vm109, %v88, 0
    %113 = vmatprep.subr.mxu0 0.0
    %114 = vmatpush1.msra.mxu0 %v87
    %115 = vmatprep.subr.mxu0 0.0
    %116 = vmatpush1.msra.mxu0 %v111
    %117 = vmatprep.subr.mxu0 0.0
    %118 = vmatpush1.msra.mxu0 0.0
    %119 = vmatprep.subr.mxu0 0.0
    %120 = vmatpush1.msra.mxu0 0.0
    %121 = vmatprep.subr.mxu0 0.0
    %122 = vmatpush1.msra.mxu0 0.0
    %123 = vmatprep.subr.mxu0 0.0
    %124 = vmatpush1.msra.mxu0 0.0
    %125 = vmatprep.subr.mxu0 0.0
    %126 = vmatpush1.msra.mxu0 0.0
    %127 = vmatprep.subr.mxu0 0.0
    %128 = vmatpush1.msra.mxu0 0.0
    %129 = vmatprep.subr.mxu0 0.0
    %130 = vmatpush1.msra.mxu0 0.0
    %131 = vmatprep.subr.mxu0 0.0
    %132 = vmatpush1.msra.mxu0 0.0
    %133 = vmatprep.subr.mxu0 0.0
    %134 = vmatpush1.msra.mxu0 0.0
    %135 = vmatprep.subr.mxu0 0.0
    %136 = vmatpush1.msra.mxu0 0.0
    %137 = vmatprep.subr.mxu0 0.0
    %138 = vmatpush1.msra.mxu0 0.0
    %139 = vmatprep.subr.mxu0 0.0
    %140 = vmatpush1.msra.mxu0 0.0
    %141 = vmatprep.subr.mxu0 0.0
    %142 = vmatpush1.msra.mxu0 0.0
    %143 = vmatprep.subr.mxu0 0.0
    %144 = vmatpush1.msra.mxu0 0.0
    %145 = vmatprep.subr.mxu0 0.0
    %146 = vmatpush1.msra.mxu0 0.0
    %147 = vmatprep.subr.mxu0 0.0
    %148 = vmatpush1.msra.mxu0 0.0
    %149 = vmatprep.subr.mxu0 0.0
    %150 = vmatpush1.msra.mxu0 0.0
    %151 = vmatprep.subr.mxu0 0.0
    %152 = vmatpush1.msra.mxu0 0.0
    %153 = vmatprep.subr.mxu0 0.0
    %154 = vmatpush1.msra.mxu0 0.0
    %155 = vmatprep.subr.mxu0 0.0
    %156 = vmatpush1.msra.mxu0 0.0
    %157 = vmatprep.subr.mxu0 0.0
    %158 = vmatpush1.msra.mxu0 0.0
    %159 = vmatprep.subr.mxu0 0.0
    %160 = vmatpush1.msra.mxu0 0.0
    %161 = vmatprep.subr.mxu0 0.0
    %162 = vmatpush1.msra.mxu0 0.0
    %163 = vmatprep.subr.mxu0 0.0
    %164 = vmatpush1.msra.mxu0 0.0
    %165 = vmatprep.subr.mxu0 0.0
    %166 = vmatpush1.msra.mxu0 0.0
    %167 = vmatprep.subr.mxu0 0.0
    %168 = vmatpush1.msra.mxu0 0.0
    %169 = vmatprep.subr.mxu0 0.0
    %170 = vmatpush1.msra.mxu0 0.0
    %171 = vmatprep.subr.mxu0 0.0
    %172 = vmatpush1.msra.mxu0 0.0
    %173 = vmatprep.subr.mxu0 0.0
    %174 = vmatpush1.msra.mxu0 0.0
    %175 = vmatprep.subr.mxu0 0.0
    %176 = vmatpush1.msra.mxu0 0.0
    %177 = vmatprep.mubr.f32.mxu0 0.0
    %178 = vmatmul.mubr.f32.gmra.mrb[0].mxu0 %v98
    %v179 = vpop.f32.mrb[0].mxu0
    %v180 = vadd.f32 %v94, %v179
    %v181 = vpop.f32.mrb[0].mxu0
    %182 = vmatprep.mubr.f32.mxu0 0.0
    %183 = vmatmul.mubr.f32.gmra.mrb[0].mxu0 %v101
    %v184 = vpop.f32.mrb[0].mxu0
    %v185 = vadd.f32 %v94, %v184
    %v186 = vpop.f32.mrb[0].mxu0
    %187 = vmatprep.mubr.f32.mxu0 0.0
    %188 = vmatmul.mubr.f32.gmra.mrb[0].mxu0 %v104
    %v189 = vpop.f32.mrb[0].mxu0
    %v190 = vadd.f32 %v94, %v189
    %v191 = vpop.f32.mrb[0].mxu0
    %192 = vmatprep.mubr.f32.mxu0 0.0
    %193 = vmatmul.mubr.f32.gmra.mrb[0].mxu0 %v107
    %v194 = vpop.f32.mrb[0].mxu0
    %v195 = vadd.f32 %v94, %v194
    %v196 = vpop.f32.mrb[0].mxu0
    %197 = vdwg.mxu0
    %vm198 = vcmask 64512
    %199 = vst.msk [vmem:[#allocation4] sm:$0xff] %vm198, %v180
    %200 = vst.msk [vmem:[#allocation4 + $0x8] sm:$0xff] %vm198, %v185
    %201 = vst.msk [vmem:[#allocation4 + $0x10] sm:$0xff] %vm198, %v190
    %vm202 = vcmask 60416
    %203 = vst.msk [vmem:[#allocation4 + $0x18] sm:$0xf] %vm202, %v195
    %v204 = vld [vmem:[#allocation4] ss:$2 sm:$0x7f]
    %s205 = scalar_lea.vmem [#allocation4], 1
    %v206 = vld [vmem:[%s205] ss:$2 sm:$0x7f]
    %v207 = vmax.f32 %v204, %v206
    %vm208 = vcmp.ge.f32.partialorder %v207, 0.0
    %v209 = vmul.f32 %v207, 0.01
    %v210 = vsel %vm208, %v207, %v209
    %vm211 = vcmask 63488
    %212 = vst.msk [vmem:[#allocation6] sm:$0x7f] %vm211, %v210
    %s213 = scalar_lea.vmem [#allocation4], 14
    %v214 = vld [vmem:[%s213] ss:$2 sm:$0x7f]
    %s215 = scalar_lea.vmem [#allocation4], 15
    %v216 = vld [vmem:[%s215] ss:$2 sm:$0x7f]
    %v217 = vmax.f32 %v214, %v216
    %vm218 = vcmp.ge.f32.partialorder %v217, 0.0
    %v219 = vmul.f32 %v217, 0.01
    %v220 = vsel %vm218, %v217, %v219
    %221 = vst.msk [vmem:[#allocation6 + $0x7] sm:$0x7f] %vm211, %v220
    %v222 = vld [vmem:[#allocation6] sm:$0x1f]
    %vm223 = vcmask 61440
    %224 = vst.msk [vmem:[#allocation3] sm:$0x1f] %vm223, %v222
    %v225 = vld [vmem:[#allocation6 + $0x1] sm:$0x1f]
    %227 = vrot.lane.b32.xlu0 %v225, 8
    %v228 = vpop.permute.xlu0 %227
    %vm230 = vcmask 127040
    %231 = vst.msk [vmem:[#allocation3] sm:$0x1f] %vm230, %v228
    %v232 = vld [vmem:[#allocation6 + $0x2] sm:$0x1f]
    %234 = vrot.lane.b32.xlu0 %v232, 16
    %v235 = vpop.permute.xlu0 %234
    %vm237 = vcmask 192640
    %238 = vst.msk [vmem:[#allocation3] sm:$0x1f] %vm237, %v235
    %v239 = vld [vmem:[#allocation6 + $0x7] sm:$0x1f]
    %240 = vst.msk [vmem:[#allocation3 + $0x5] sm:$0x1f] %vm223, %v239
    %v241 = vld [vmem:[#allocation6 + $0x8] sm:$0x1f]
    %243 = vrot.lane.b32.xlu0 %v241, 8
    %v244 = vpop.permute.xlu0 %243
    %246 = vst.msk [vmem:[#allocation3 + $0x5] sm:$0x1f] %vm230, %v244
    %v247 = vld [vmem:[#allocation6 + $0x9] sm:$0x1f]
    %249 = vrot.lane.b32.xlu0 %v247, 16
    %v250 = vpop.permute.xlu0 %249
    %252 = vst.msk [vmem:[#allocation3 + $0x5] sm:$0x1f] %vm237, %v250
    %v253 = vld [vmem:[#allocation3] sm:$0xff]
    %v254 = vld [vmem:[#allocation3 + $0x8] sm:$0x3]
    %v255 = vld [vmem:[%s3] sm:$0xff]
    %v256 = vld [vmem:[%s3 + $0x8] sm:$0xff]
    %v257 = vld [vmem:[%s3 + $0x10] sm:$0xff]
    %v258 = vld [vmem:[%s4] sm:$0x1]
    %v260 = vlaneseq
    %v261 = vshrl.u32 %v260, 7
    %v262 = vsub.s32 0, %v261
    %v263 = vrot.slane %v258, %v262
    %vm265 = vcmask 195584
    %v267 = vsel %vm265, %v253, 0
    %v270 = vsel %vm265, %v254, 0
    %272 = vmatprep.subr.mxu0 0.0
    %273 = vmatpush1.msra.mxu0 %v255
    %274 = vmatprep.subr.mxu0 0.0
    %275 = vmatpush1.msra.mxu0 %v256
    %276 = vmatprep.subr.mxu0 0.0
    %277 = vmatpush1.msra.mxu0 %v257
    %278 = vmatprep.subr.mxu0 0.0
    %279 = vmatpush1.msra.mxu0 0.0
    %280 = vmatprep.subr.mxu0 0.0
    %281 = vmatpush1.msra.mxu0 0.0
    %282 = vmatprep.subr.mxu0 0.0
    %283 = vmatpush1.msra.mxu0 0.0
    %284 = vmatprep.subr.mxu0 0.0
    %285 = vmatpush1.msra.mxu0 0.0
    %286 = vmatprep.subr.mxu0 0.0
    %287 = vmatpush1.msra.mxu0 0.0
    %288 = vmatprep.subr.mxu0 0.0
    %289 = vmatpush1.msra.mxu0 0.0
    %290 = vmatprep.subr.mxu0 0.0
    %291 = vmatpush1.msra.mxu0 0.0
    %292 = vmatprep.subr.mxu0 0.0
    %293 = vmatpush1.msra.mxu0 0.0
    %294 = vmatprep.subr.mxu0 0.0
    %295 = vmatpush1.msra.mxu0 0.0
    %296 = vmatprep.subr.mxu0 0.0
    %297 = vmatpush1.msra.mxu0 0.0
    %298 = vmatprep.subr.mxu0 0.0
    %299 = vmatpush1.msra.mxu0 0.0
    %300 = vmatprep.subr.mxu0 0.0
    %301 = vmatpush1.msra.mxu0 0.0
    %302 = vmatprep.subr.mxu0 0.0
    %303 = vmatpush1.msra.mxu0 0.0
    %304 = vmatprep.subr.mxu0 0.0
    %305 = vmatpush1.msra.mxu0 0.0
    %306 = vmatprep.subr.mxu0 0.0
    %307 = vmatpush1.msra.mxu0 0.0
    %308 = vmatprep.subr.mxu0 0.0
    %309 = vmatpush1.msra.mxu0 0.0
    %310 = vmatprep.subr.mxu0 0.0
    %311 = vmatpush1.msra.mxu0 0.0
    %312 = vmatprep.subr.mxu0 0.0
    %313 = vmatpush1.msra.mxu0 0.0
    %314 = vmatprep.subr.mxu0 0.0
    %315 = vmatpush1.msra.mxu0 0.0
    %316 = vmatprep.subr.mxu0 0.0
    %317 = vmatpush1.msra.mxu0 0.0
    %318 = vmatprep.subr.mxu0 0.0
    %319 = vmatpush1.msra.mxu0 0.0
    %320 = vmatprep.subr.mxu0 0.0
    %321 = vmatpush1.msra.mxu0 0.0
    %322 = vmatprep.subr.mxu0 0.0
    %323 = vmatpush1.msra.mxu0 0.0
    %324 = vmatprep.subr.mxu0 0.0
    %325 = vmatpush1.msra.mxu0 0.0
    %326 = vmatprep.subr.mxu0 0.0
    %327 = vmatpush1.msra.mxu0 0.0
    %328 = vmatprep.subr.mxu0 0.0
    %329 = vmatpush1.msra.mxu0 0.0
    %330 = vmatprep.subr.mxu0 0.0
    %331 = vmatpush1.msra.mxu0 0.0
    %332 = vmatprep.subr.mxu0 0.0
    %333 = vmatpush1.msra.mxu0 0.0
    %334 = vmatprep.subr.mxu0 0.0
    %335 = vmatpush1.msra.mxu0 0.0
    %336 = vmatprep.mubr.f32.mxu0 0.0
    %337 = vmatmul.mubr.f32.gmra.mrb[0].mxu0 %v267
    %v338 = vpop.f32.mrb[0].mxu0
    %v339 = vadd.f32 %v263, %v338
    %v340 = vpop.f32.mrb[0].mxu0
    %341 = vmatprep.mubr.f32.mxu0 0.0
    %342 = vmatmul.mubr.f32.gmra.mrb[0].mxu0 %v270
    %v343 = vpop.f32.mrb[0].mxu0
    %v344 = vadd.f32 %v263, %v343
    %v345 = vpop.f32.mrb[0].mxu0
    %346 = vdwg.mxu0
    %vm347 = vcmask 130048
    %348 = vst.msk [vmem:[#allocation5] sm:$0xff] %vm347, %v339
    %vm349 = vcmask 123904
    %350 = vst.msk [vmem:[#allocation5 + $0x8] sm:$0x3] %vm349, %v344
    %v351 = vld [vmem:[#allocation5] ss:$2 sm:$0x3]
    %s352 = scalar_lea.vmem [#allocation5], 1
    %v353 = vld [vmem:[%s352] ss:$2 sm:$0x3]
    %v354 = vmax.f32 %v351, %v353
    %vm355 = vcmp.ge.f32.partialorder %v354, 0.0
    %v356 = vmul.f32 %v354, 0.01
    %v357 = vsel %vm355, %v354, %v356
    %358 = vst.msk [vmem:[#allocation7] sm:$0x3] %vm349, %v357
    %s359 = scalar_lea.vmem [#allocation5], 5
    %v360 = vld [vmem:[%s359] ss:$2 sm:$0x3]
    %s361 = scalar_lea.vmem [#allocation5], 6
    %v362 = vld [vmem:[%s361] ss:$2 sm:$0x3]
    %v363 = vmax.f32 %v360, %v362
    %vm364 = vcmp.ge.f32.partialorder %v363, 0.0
    %v365 = vmul.f32 %v363, 0.01
    %v366 = vsel %vm364, %v363, %v365
    %367 = vst.msk [vmem:[#allocation7 + $0x2] sm:$0x3] %vm349, %v366
    // Predicated region
    $region22: #{tpu_custom_call.1} parent=1 // pred_check
      _
    $region23: #{tpu_custom_call.1} parent=1 // pred_check_branch
      %369 = sbr.rel (0) target = $region25
    $region24: #{tpu_custom_call.1} parent=1 // pred_region
      %s371 = ssub.s32 64, 64
      %372 = vsyncadd [#allocation8], %s371
      %s374 = sshll.u32 [#allocation7], 4
      %s375 = int_to_ptr.vmem [resolvable:$true] %s374
      %377 = dma.vmem_to_hbm [thread:$0]  %s375, 64, %s5, [#allocation8]
    $region25: #{tpu_custom_call.1} parent=1 // pred_fallthru
      _
    // Predicated region
    $region26: #{tpu_custom_call.1} parent=1 // pred_check
      _
    $region27: #{tpu_custom_call.1} parent=1 // pred_check_branch
      %379 = sbr.rel (0) target = $region29
    $region28: #{tpu_custom_call.1} parent=1 // pred_region
      %380 = dma.done [#allocation8], 64
    $region29: #{tpu_custom_call.1} parent=1 // pred_fallthru
      _
    %381 = vsyncpa [#allocation8], 1

</llo_original>
